<compile_context>
chip_gen: v6e
topology: v6e:2x2x1
jax: 0.10.0
libtpu: 0.0.40
codegen_flags: <defaults>
</compile_context>

<pallas_src>
import functools
import math

import jax
import jax.numpy as jnp
from jax import lax
from jax.experimental import pallas as pl
from jax.experimental.pallas import tpu as pltpu

_MASK_VALUE = -1e30                 # large finite negative (NaN-safe masking)
_VMEM_LIMIT = 48 * 1024 * 1024      # > 16/32 MiB defaults, < v7x 64 MiB physical


# ---------------------------------------------------------------------------
# tile helpers (respect the (8,128) block rules; bf16 needs 16-row sublanes)
# ---------------------------------------------------------------------------
def _sublane_min(dtype):
    return 16 if jnp.dtype(dtype).itemsize == 2 else 8


def _pick_sublane_tile(n, pref, dtype=jnp.float32):
    """Tile for a second-to-last block dim: divides n, multiple of 8/16 (or full)."""
    lo = _sublane_min(dtype)
    if n <= pref:
        return n
    t = pref
    while t >= lo and n % t:
        t //= 2
    return t if t >= lo and n % t == 0 else n


def _pick_lane_tile(n, pref):
    """Tile for a last block dim: divides n, multiple of 128 (or full)."""
    if n <= pref:
        return n
    t = pref
    while t >= 128 and n % t:
        t //= 2
    return t if t >= 128 and n % t == 0 else n


# ---------------------------------------------------------------------------
# 1) shared K-tiled matmul + bias kernel:  out = x @ W + b
#    grid = (R/tm, N/tn, K/tk), f32 accumulator, bias added at the last K step
# ---------------------------------------------------------------------------
def _matmul_bias_kernel(x_ref, w_ref, b_ref, o_ref, acc_ref):
    k = pl.program_id(2)

    @pl.when(k == 0)
    def _():
        acc_ref[...] = jnp.zeros(acc_ref.shape, jnp.float32)

    acc_ref[...] += jnp.dot(x_ref[...], w_ref[...],
                            preferred_element_type=jnp.float32)

    @pl.when(k == pl.num_programs(2) - 1)
    def _():
        o_ref[...] = (acc_ref[...] + b_ref[...]).astype(o_ref.dtype)


def _matmul_bias(x2d, w, b, *, out_dtype):
    R, K = x2d.shape
    Kw, N = w.shape
    assert K == Kw
    tm = _pick_sublane_tile(R, 512, x2d.dtype)   # big row tile -> fewer weight passes
    tn = _pick_lane_tile(N, 512)                 # lane-dense output stores
    tk = _pick_lane_tile(K, 512)                 # bounded VMEM blocks (no full-K load)
    grid = (R // tm, N // tn, K // tk)
    return pl.pallas_call(
        _matmul_bias_kernel,
        out_shape=jax.ShapeDtypeStruct((R, N), out_dtype),
        grid_spec=pltpu.PrefetchScalarGridSpec(
            num_scalar_prefetch=0,
            grid=grid,
            in_specs=[pl.BlockSpec((tm, tk), lambda i, j, k: (i, k)),
                      pl.BlockSpec((tk, tn), lambda i, j, k: (k, j)),
                      pl.BlockSpec((1, tn), lambda i, j, k: (0, j))],
            out_specs=pl.BlockSpec((tm, tn), lambda i, j, k: (i, j)),
            scratch_shapes=[pltpu.VMEM((tm, tn), jnp.float32)],
        ),
        compiler_params=pltpu.CompilerParams(
            dimension_semantics=("parallel", "parallel", "arbitrary"),
            vmem_limit_bytes=_VMEM_LIMIT),
    )(x2d, w, b)


# ---------------------------------------------------------------------------
# 2) flash attention kernel (causal, all heads batched per block)
#    q already carries the 1/sqrt(D) scale (folded into the weights).
# ---------------------------------------------------------------------------
def _flash_kernel(q_ref, k_ref, v_ref, o_ref, m_sc, l_sc, acc_sc, *, tq, tk):
    qi = pl.program_id(1)
    kj = pl.program_id(2)

    @pl.when(kj == 0)
    def _():
        # kj == 0 is always at/below the diagonal, so m becomes finite on the
        # first accumulated tile -> the -1e30 init never produces NaNs.
        m_sc[...] = jnp.full(m_sc.shape, _MASK_VALUE, jnp.float32)
        l_sc[...] = jnp.zeros(l_sc.shape, jnp.float32)
        acc_sc[...] = jnp.zeros(acc_sc.shape, jnp.float32)

    q_start = qi * tq
    q_end = q_start + (tq - 1)
    kv_start = kj * tk
    kv_end = kv_start + (tk - 1)

    def _accumulate(masked):
        q = q_ref[0]                             # (H, tq, D), pre-scaled
        k = k_ref[0]                             # (H, tk, D)
        v = v_ref[0]                             # (H, tk, D)
        # contract last dims directly (no explicit transpose), heads batched
        s = jnp.einsum('hqd,hkd->hqk', q, k,
                       preferred_element_type=jnp.float32)     # (H, tq, tk) f32
        if masked:  # only the diagonal q/kv tiles build a mask
            rows = q_start + lax.broadcasted_iota(jnp.int32, (tq, tk), 0)
            cols = kv_start + lax.broadcasted_iota(jnp.int32, (tq, tk), 1)
            s = jnp.where((cols <= rows)[None, :, :], s, _MASK_VALUE)

        m_prev = m_sc[...]
        m_new = jnp.maximum(m_prev, jnp.max(s, axis=-1, keepdims=True))
        alpha = jnp.exp(m_prev - m_new)
        p = jnp.exp(s - m_new)
        l_sc[...] = alpha * l_sc[...] + jnp.sum(p, axis=-1, keepdims=True)
        acc_sc[...] = alpha * acc_sc[...] + jnp.einsum(
            'hqk,hkd->hqd', p.astype(v.dtype), v,
            preferred_element_type=jnp.float32)
        m_sc[...] = m_new

    # fully-visible tile: no mask work at all
    @pl.when(kv_end <= q_start)
    def _():
        _accumulate(masked=False)

    # diagonal (partially masked) tile
    @pl.when(jnp.logical_and(kv_start <= q_end, kv_end > q_start))
    def _():
        _accumulate(masked=True)

    # Finalize on the diagonal step: with tq == tk the last contributing kv
    # tile for q tile `qi` is kj == qi.  Later kv steps for this q tile are
    # complete no-ops (and their K/V DMAs are elided by the clamped index_map).
    @pl.when(kj == qi)
    def _():
        l = l_sc[...]
        inv = pl.reciprocal(l, approx=True)      # EUP slot
        inv = inv * (2.0 - l * inv)              # one Newton step -> f32 accuracy
        o_ref[0] = (acc_sc[...] * inv).astype(o_ref.dtype)


def _flash_attention(q, k, v):
    B, H, T, D = q.shape
    tq = _pick_sublane_tile(T, 256, q.dtype)     # 256 fills the v6e/v7x MXU width
    tk = tq                                      # equal tiles keep masking simple
    assert tq == tk
    grid = (B, T // tq, T // tk)
    kernel = functools.partial(_flash_kernel, tq=tq, tk=tk)
    # Clamp the kv block index to the diagonal: skipped (fully masked) steps
    # revisit the previous block index, so Pallas elides the K/V copies.
    kv_map = lambda b, i, j: (b, 0, jnp.minimum(i, j), 0)
    return pl.pallas_call(
        kernel,
        out_shape=jax.ShapeDtypeStruct((B, H, T, D), q.dtype),
        grid_spec=pltpu.PrefetchScalarGridSpec(
            num_scalar_prefetch=0,
            grid=grid,
            in_specs=[pl.BlockSpec((1, H, tq, D), lambda b, i, j: (b, 0, i, 0)),
                      pl.BlockSpec((1, H, tk, D), kv_map),
                      pl.BlockSpec((1, H, tk, D), kv_map)],
            out_specs=pl.BlockSpec((1, H, tq, D), lambda b, i, j: (b, 0, i, 0)),
            scratch_shapes=[pltpu.VMEM((H, tq, 1), jnp.float32),   # m
                            pltpu.VMEM((H, tq, 1), jnp.float32),   # l
                            pltpu.VMEM((H, tq, D), jnp.float32)],  # acc
        ),
        compiler_params=pltpu.CompilerParams(
            dimension_semantics=("parallel", "parallel", "arbitrary"),
            vmem_limit_bytes=_VMEM_LIMIT),
    )(q, k, v)


# ---------------------------------------------------------------------------
# parameter prep (one-time, weight-load time): fuse QKV, fold 1/sqrt(D) into
# the Q columns, cast weights to the compute dtype (f32 scale before the cast).
# ---------------------------------------------------------------------------
def prepare_params(params, n_head, compute_dtype=jnp.float32):
    C = params["wp"].shape[0]
    assert C % n_head == 0
    D = C // n_head
    scale = 1.0 / math.sqrt(D)
    col_scale = jnp.concatenate([jnp.full((C,), scale, jnp.float32),
                                 jnp.ones((2 * C,), jnp.float32)])
    return dict(
        wqkv=(params["wqkv"] * col_scale[None, :]).astype(compute_dtype),
        bqkv=(params["bqkv"] * col_scale[None, :]).astype(jnp.float32),
        wp=params["wp"].astype(compute_dtype),
        bp=params["bp"].astype(jnp.float32),
    )


# ---------------------------------------------------------------------------
# full module forward (eval mode)
# ---------------------------------------------------------------------------
def causal_self_attention(x, prepared, n_head):
    """x: (B, T, C). prepared: output of prepare_params (scale pre-folded)."""
    B, T, C = x.shape
    assert C % n_head == 0
    D = C // n_head
    dtype = prepared["wqkv"].dtype
    xc = x.astype(dtype)

    # 1) fused, K-tiled QKV projection (scale already folded into Q columns)
    qkv = _matmul_bias(xc.reshape(B * T, C), prepared["wqkv"], prepared["bqkv"],
                       out_dtype=dtype)

    # split into (B, H, T, D) — layout plumbing done by XLA outside kernels
    qkv = qkv.reshape(B, T, 3, n_head, D).transpose(2, 0, 3, 1, 4)
    q, k, v = qkv[0], qkv[1], qkv[2]

    # 2) causal flash attention
    y = _flash_attention(q, k, v)                              # (B, H, T, D)

    # 3) head merge (one XLA transpose) + K=C-tiled output projection
    y2d = y.transpose(0, 2, 1, 3).reshape(B * T, C)
    out = _matmul_bias(y2d, prepared["wp"], prepared["bp"], out_dtype=x.dtype)
    return out.reshape(B, T, C)


# ---------------------------------------------------------------------------
# pure-JAX reference (mirrors the PyTorch forward, eval mode) + params
# ---------------------------------------------------------------------------
def _reference(x, params, n_head):
    B, T, C = x.shape
    D = C // n_head
    wqkv, bqkv = params["wqkv"], params["bqkv"]
    q = x @ wqkv[:, :C] + bqkv[0, :C]
    k = x @ wqkv[:, C:2 * C] + bqkv[0, C:2 * C]
    v = x @ wqkv[:, 2 * C:] + bqkv[0, 2 * C:]
    q = q.reshape(B, T, n_head, D).transpose(0, 2, 1, 3)
    k = k.reshape(B, T, n_head, D).transpose(0, 2, 1, 3)
    v = v.reshape(B, T, n_head, D).transpose(0, 2, 1, 3)
    att = jnp.einsum("bhtd,bhsd->bhts", q, k) * (1.0 / math.sqrt(D))
    mask = jnp.tril(jnp.ones((T, T), dtype=bool))
    att = jnp.where(mask[None, None], att, -jnp.inf)
    att = jax.nn.softmax(att, axis=-1)
    y = jnp.einsum("bhts,bhsd->bhtd", att, v)
    y = y.transpose(0, 2, 1, 3).reshape(B, T, C)
    return y @ params["wp"] + params["bp"][0]


def init_params(key, n_embd):
    """nn.Linear-style init; weights stored (in, out); QKV pre-fused to (C, 3C)."""
    ks = jax.random.split(key, 8)
    bound = 1.0 / math.sqrt(n_embd)

    def w(k):
        return jax.random.uniform(k, (n_embd, n_embd), jnp.float32, -bound, bound)

    def b(k):
        return jax.random.uniform(k, (1, n_embd), jnp.float32, -bound, bound)

    wq, wk, wv = w(ks[0]), w(ks[2]), w(ks[4])
    bq, bk, bv = b(ks[1]), b(ks[3]), b(ks[5])
    return dict(wqkv=jnp.concatenate([wq, wk, wv], axis=1),
                bqkv=jnp.concatenate([bq, bk, bv], axis=1),
                wp=w(ks[6]), bp=b(ks[7]))


if __name__ == "__main__":
    # small shape consistent with the module (block_size=8, n_embd=32, n_head=4)
    B, T, C, H = 2, 8, 32, 4
    kx, kp = jax.random.split(jax.random.PRNGKey(0))
    x = jax.random.normal(kx, (B, T, C), jnp.float32)
    params = init_params(kp, C)
    ref = _reference(x, params, H)

    pp = prepare_params(params, H)                          # one-time weight prep
    out = jax.block_until_ready(causal_self_attention(x, pp, H))
    assert out.shape == (B, T, C)
    assert jnp.allclose(out, ref, atol=1e-4, rtol=1e-4), "f32 mismatch vs reference"

    # bf16 compute path (half HBM traffic, native MXU dtype), f32 accumulation
    pp_bf16 = prepare_params(params, H, compute_dtype=jnp.bfloat16)
    out_bf16 = jax.block_until_ready(causal_self_attention(x, pp_bf16, H))
    assert jnp.allclose(out_bf16, ref, atol=5e-2, rtol=5e-2), "bf16 mismatch"

    # larger shape exercising the tiled flash path: 2x2 q/kv tiles at tq=tk=256,
    # including one fully-masked step whose K/V DMA is elided by the clamp.
    B2, T2, C2, H2 = 2, 512, 128, 4
    kx2, kp2 = jax.random.split(jax.random.PRNGKey(1))
    x2 = jax.random.normal(kx2, (B2, T2, C2), jnp.float32)
    params2 = init_params(kp2, C2)
    pp2 = prepare_params(params2, H2)
    out2 = jax.block_until_ready(causal_self_attention(x2, pp2, H2))
    ref2 = _reference(x2, params2, H2)
    assert jnp.allclose(out2, ref2, atol=2e-3, rtol=2e-3), "tiled-path mismatch"

    print("KERNEL_OK")
</pallas_src>

<mosaic_0001>
module attributes {stable_mosaic.version = 11 : i64} {
  func.func @_matmul_bias_kernel(%arg0: i32, %arg1: i32, %arg2: i32, %arg3: memref<16x32xf32, #tpu.memory_space<vmem>>, %arg4: memref<32x96xf32, #tpu.memory_space<vmem>>, %arg5: memref<1x96xf32, #tpu.memory_space<vmem>>, %arg6: memref<16x96xf32, #tpu.memory_space<vmem>>, %arg7: memref<16x96xf32, #tpu.memory_space<vmem>>) attributes {dimension_semantics = [#tpu.dimension_semantics<parallel>, #tpu.dimension_semantics<parallel>, #tpu.dimension_semantics<arbitrary>], iteration_bounds = array<i64: 1, 1, 1>, scalar_prefetch = 0 : i64, scratch_operands = 1 : i64, tpu.core_type = #tpu.core_type<tc>, window_params = [{transform_indices = @transform_0, window_bounds = array<i64: 16, 32>}, {transform_indices = @transform_1, window_bounds = array<i64: 32, 96>}, {transform_indices = @transform_2, window_bounds = array<i64: 1, 96>}, {transform_indices = @transform_3, window_bounds = array<i64: 16, 96>}]} {
    %c0_i32 = arith.constant 0 : i32
    %0 = arith.cmpi eq, %arg2, %c0_i32 : i32
    %1 = arith.extui %0 : i1 to i32
    %c0_i32_0 = arith.constant 0 : i32
    %2 = arith.cmpi ne, %1, %c0_i32_0 : i32
    scf.if %2 {
      %cst_10 = arith.constant 0.000000e+00 : f32
      %12 = vector.broadcast %cst_10 : f32 to vector<16x96xf32>
      %c0_11 = arith.constant 0 : index
      %c0_12 = arith.constant 0 : index
      %13 = vector.load %arg7[%c0_11, %c0_12] : memref<16x96xf32, #tpu.memory_space<vmem>>, vector<16x96xf32>
      tpu.vector_store %arg7[%c0_11, %c0_12], %12 {strides = array<i32>} : memref<16x96xf32, #tpu.memory_space<vmem>>, vector<16x96xf32>,
    } else {
    }
    %c0 = arith.constant 0 : index
    %c0_1 = arith.constant 0 : index
    %3 = vector.load %arg7[%c0, %c0_1] : memref<16x96xf32, #tpu.memory_space<vmem>>, vector<16x96xf32>
    %c0_2 = arith.constant 0 : index
    %c0_3 = arith.constant 0 : index
    %4 = vector.load %arg3[%c0_2, %c0_3] : memref<16x32xf32, #tpu.memory_space<vmem>>, vector<16x32xf32>
    %c0_4 = arith.constant 0 : index
    %c0_5 = arith.constant 0 : index
    %5 = vector.load %arg4[%c0_4, %c0_5] : memref<32x96xf32, #tpu.memory_space<vmem>>, vector<32x96xf32>
    %cst = arith.constant dense<0.000000e+00> : vector<16x96xf32>
    %6 = tpu.matmul %4, %5, %cst {dimension_numbers = #tpu.dot_dimension_numbers<[1], [0], [0], [1], [0, 0, 1, 1], [], []>} : vector<16x32xf32>, vector<32x96xf32>, vector<16x96xf32> -> vector<16x96xf32>
    %7 = arith.addf %3, %6 : vector<16x96xf32>
    %c0_6 = arith.constant 0 : index
    %c0_7 = arith.constant 0 : index
    %8 = vector.load %arg7[%c0_6, %c0_7] : memref<16x96xf32, #tpu.memory_space<vmem>>, vector<16x96xf32>
    tpu.vector_store %arg7[%c0_6, %c0_7], %7 {strides = array<i32>} : memref<16x96xf32, #tpu.memory_space<vmem>>, vector<16x96xf32>,
    %c0_i32_8 = arith.constant 0 : i32
    %9 = arith.cmpi eq, %arg2, %c0_i32_8 : i32
    %10 = arith.extui %9 : i1 to i32
    %c0_i32_9 = arith.constant 0 : i32
    %11 = arith.cmpi ne, %10, %c0_i32_9 : i32
    scf.if %11 {
      %c0_10 = arith.constant 0 : index
      %c0_11 = arith.constant 0 : index
      %12 = vector.load %arg7[%c0_10, %c0_11] : memref<16x96xf32, #tpu.memory_space<vmem>>, vector<16x96xf32>
      %c0_12 = arith.constant 0 : index
      %c0_13 = arith.constant 0 : index
      %13 = vector.load %arg5[%c0_12, %c0_13] : memref<1x96xf32, #tpu.memory_space<vmem>>, vector<1x96xf32>
      %14 = vector.broadcast %13 : vector<1x96xf32> to vector<16x96xf32>
      %15 = arith.addf %12, %14 : vector<16x96xf32>
      %c0_14 = arith.constant 0 : index
      %c0_15 = arith.constant 0 : index
      %16 = vector.load %arg6[%c0_14, %c0_15] : memref<16x96xf32, #tpu.memory_space<vmem>>, vector<16x96xf32>
      tpu.vector_store %arg6[%c0_14, %c0_15], %15 {strides = array<i32>} : memref<16x96xf32, #tpu.memory_space<vmem>>, vector<16x96xf32>,
    } else {
    }
    return
  }
  func.func @transform_0(%arg0: i32, %arg1: i32, %arg2: i32) -> (i32, i32) {
    %c0_i32 = arith.constant 0 : i32
    return %arg0, %arg2 : i32, i32
  }
  func.func @transform_1(%arg0: i32, %arg1: i32, %arg2: i32) -> (i32, i32) {
    %c0_i32 = arith.constant 0 : i32
    return %arg2, %arg1 : i32, i32
  }
  func.func @transform_2(%arg0: i32, %arg1: i32, %arg2: i32) -> (i32, i32) {
    %c0_i32 = arith.constant 0 : i32
    %c0_i32_0 = arith.constant 0 : i32
    return %c0_i32, %arg1 : i32, i32
  }
  func.func @transform_3(%arg0: i32, %arg1: i32, %arg2: i32) -> (i32, i32) {
    %c0_i32 = arith.constant 0 : i32
    return %arg0, %arg1 : i32, i32
  }
}

</mosaic_0001>

<llo_original>
// kernel: tpu_custom_call.1
$region0: #{tpu_custom_call.1}
  #allocation0 [shape = 'u32[]', space=smem, size = 0x4, offset = 0x4, fixed_abs, tag = 'smem constant byte address 0x4 - core index']
  #allocation1 [shape = 'u32[144,128]{1,0:T(1,128)}', space=vmem, size = 0x12000, scoped, tag = 'internal scratch']
  #allocation2 [shape = 'f32[16,96]{1,0:T(8,128)}', space=vmem, size = 0x2000, scoped, tag = 'scratch operand']
  %s0 = inlined_call_operand.hbm [shape: f32[16,32], index: 0, kind: input, shape index: {}]
  %s1 = inlined_call_operand.hbm [shape: f32[32,96], index: 1, kind: input, shape index: {}]
  %s2 = inlined_call_operand.vmem [shape: f32[1,96], index: 2, kind: input, shape index: {}]
  %s3 = inlined_call_operand.hbm [shape: f32[16,96], index: 3, kind: output, shape index: {}]
  %s4 = sld [smem:[#allocation0]]
  $region38: #{tpu_custom_call.1} parent=0
    _
  %s6 = ssub.s32 1, %s4
  %s7 = scalar_select 0, %s6, %s4
  $region1: #{tpu_custom_call.1} parent=0
    #allocation3 [shape = 'u8[8192]{0}', space=vmem, size = 0x2000, scoped, tag = 'input window, operand 0, single buffered']
    #allocation4 [shape = 's32[1]{0}', space=sflag, size = 0x4, scoped, tag = 'scoped memory for tpu_custom_call.1']
    #allocation5 [shape = 's32[1]{0}', space=sflag, size = 0x4, scoped, tag = 'scoped memory for tpu_custom_call.1']
    #allocation6 [shape = 'u8[16384]{0}', space=vmem, size = 0x4000, scoped, tag = 'input window, operand 1, single buffered']
    #allocation7 [shape = 's32[1]{0}', space=sflag, size = 0x4, scoped, tag = 'scoped memory for tpu_custom_call.1']
    #allocation8 [shape = 'u8[8192]{0}', space=vmem, size = 0x2000, scoped, tag = 'output window, operand 0, single buffered']
    %8 = vsyncpa [#allocation4], 0
    %9 = vsyncpa [#allocation7], 0
    %10 = vsyncpa [#allocation5], 0
    // Predicated region
    $region2: #{tpu_custom_call.1} parent=1 // pred_check
      _
    $region3: #{tpu_custom_call.1} parent=1 // pred_check_branch
      %12 = sbr.rel (0) target = $region5
    $region4: #{tpu_custom_call.1} parent=1 // pred_region
      %s14 = ssub.s32 256, 256
      %15 = vsyncadd [#allocation4], %s14
      %s16 = sshll.u32 [#allocation3], 4
      %s17 = int_to_ptr.vmem [resolvable:$true] %s16
      %22 = dma.hbm_to_vmem [thread:$0]  %s0, 256, %s17, [#allocation4], 128, 128, 8
    $region5: #{tpu_custom_call.1} parent=1 // pred_fallthru
      _
    // Predicated region
    $region6: #{tpu_custom_call.1} parent=1 // pred_check
      _
    $region7: #{tpu_custom_call.1} parent=1 // pred_check_branch
      %24 = sbr.rel (0) target = $region9
    $region8: #{tpu_custom_call.1} parent=1 // pred_region
      %s26 = ssub.s32 512, 512
      %27 = vsyncadd [#allocation7], %s26
      %s28 = sshll.u32 [#allocation6], 4
      %s29 = int_to_ptr.vmem [resolvable:$true] %s28
      %34 = dma.hbm_to_vmem [thread:$0]  %s1, 512, %s29, [#allocation7], 128, 128, 8
    $region9: #{tpu_custom_call.1} parent=1 // pred_fallthru
      _
    // Predicated region
    $region10: #{tpu_custom_call.1} parent=1 // pred_check
      _
    $region11: #{tpu_custom_call.1} parent=1 // pred_check_branch
      %36 = sbr.rel (0) target = $region13
    $region12: #{tpu_custom_call.1} parent=1 // pred_region
      _
    $region13: #{tpu_custom_call.1} parent=1 // pred_fallthru
      _
    // Predicated region
    $region14: #{tpu_custom_call.1} parent=1 // pred_check
      _
    $region15: #{tpu_custom_call.1} parent=1 // pred_check_branch
      %38 = sbr.rel (0) target = $region17
    $region16: #{tpu_custom_call.1} parent=1 // pred_region
      %39 = dma.done [#allocation4], 256
    $region17: #{tpu_custom_call.1} parent=1 // pred_fallthru
      _
    // Predicated region
    $region18: #{tpu_custom_call.1} parent=1 // pred_check
      _
    $region19: #{tpu_custom_call.1} parent=1 // pred_check_branch
      %41 = sbr.rel (0) target = $region21
    $region20: #{tpu_custom_call.1} parent=1 // pred_region
      %42 = dma.done [#allocation7], 512
    $region21: #{tpu_custom_call.1} parent=1 // pred_fallthru
      _
    %p43 = scmp.eq.s32.totalorder 0, 0
    // Predicated region
    $region22: #{tpu_custom_call.1} parent=1 // pred_check
      %p44 = pneg %p43
    $region23: #{tpu_custom_call.1} parent=1 // pred_check_branch
      %46 = sbr.rel (%p44) target = $region25
    $region24: #{tpu_custom_call.1} parent=1 // pred_region
      %vm47 = vcmask 785408
      %48 = vst.msk [vmem:[#allocation2] sm:$0xff] %vm47, 0.0
      %49 = vst.msk [vmem:[#allocation2 + $0x8] sm:$0xff] %vm47, 0.0
    $region25: #{tpu_custom_call.1} parent=1 // pred_fallthru
      _
    %v50 = vld [vmem:[#allocation2] sm:$0xff]
    %v51 = vld [vmem:[#allocation2 + $0x8] sm:$0xff]
    %v52 = vld [vmem:[#allocation3] sm:$0xff]
    %v53 = vld [vmem:[#allocation3 + $0x8] sm:$0xff]
    %v54 = vld [vmem:[#allocation6] sm:$0xff]
    %v55 = vld [vmem:[#allocation6 + $0x8] sm:$0xff]
    %v56 = vld [vmem:[#allocation6 + $0x10] sm:$0xff]
    %v57 = vld [vmem:[#allocation6 + $0x18] sm:$0xff]
    %vm58 = vcmask 261120
    %v60 = vsel %vm58, %v52, 0
    %v63 = vsel %vm58, %v53, 0
    %65 = vmatprep.subr.mxu0 0.0
    %66 = vmatpush1.msra.mxu0 0.0
    %67 = vmatprep.subr.mxu0 0.0
    %68 = vmatpush1.msra.mxu0 0.0
    %69 = vmatprep.subr.mxu0 0.0
    %70 = vmatpush1.msra.mxu0 0.0
    %71 = vmatprep.subr.mxu0 0.0
    %72 = vmatpush1.msra.mxu0 0.0
    %73 = vmatprep.subr.mxu0 0.0
    %74 = vmatpush1.msra.mxu0 0.0
    %75 = vmatprep.subr.mxu0 0.0
    %76 = vmatpush1.msra.mxu0 0.0
    %77 = vmatprep.subr.mxu0 0.0
    %78 = vmatpush1.msra.mxu0 0.0
    %79 = vmatprep.subr.mxu0 0.0
    %80 = vmatpush1.msra.mxu0 0.0
    %81 = vmatprep.subr.mxu0 0.0
    %82 = vmatpush1.msra.mxu0 0.0
    %83 = vmatprep.subr.mxu0 0.0
    %84 = vmatpush1.msra.mxu0 0.0
    %85 = vmatprep.subr.mxu0 0.0
    %86 = vmatpush1.msra.mxu0 0.0
    %87 = vmatprep.subr.mxu0 0.0
    %88 = vmatpush1.msra.mxu0 0.0
    %89 = vmatprep.subr.mxu0 0.0
    %90 = vmatpush1.msra.mxu0 %v57
    %91 = vmatprep.subr.mxu0 0.0
    %92 = vmatpush1.msra.mxu0 %v56
    %93 = vmatprep.subr.mxu0 0.0
    %94 = vmatpush1.msra.mxu0 %v55
    %95 = vmatprep.subr.mxu0 0.0
    %96 = vmatpush1.msra.mxu0 %v54
    %97 = vmatprep.subr.mxu0 0.0
    %98 = vmatpush2.msra.mxu0 0.0
    %99 = vmatprep.subr.mxu0 0.0
    %100 = vmatpush2.msra.mxu0 0.0
    %101 = vmatprep.subr.mxu0 0.0
    %102 = vmatpush2.msra.mxu0 0.0
    %103 = vmatprep.subr.mxu0 0.0
    %104 = vmatpush2.msra.mxu0 0.0
    %105 = vmatprep.subr.mxu0 0.0
    %106 = vmatpush2.msra.mxu0 0.0
    %107 = vmatprep.subr.mxu0 0.0
    %108 = vmatpush2.msra.mxu0 0.0
    %109 = vmatprep.subr.mxu0 0.0
    %110 = vmatpush2.msra.mxu0 0.0
    %111 = vmatprep.subr.mxu0 0.0
    %112 = vmatpush2.msra.mxu0 0.0
    %113 = vmatprep.subr.mxu0 0.0
    %114 = vmatpush2.msra.mxu0 0.0
    %115 = vmatprep.subr.mxu0 0.0
    %116 = vmatpush2.msra.mxu0 0.0
    %117 = vmatprep.subr.mxu0 0.0
    %118 = vmatpush2.msra.mxu0 0.0
    %119 = vmatprep.subr.mxu0 0.0
    %120 = vmatpush2.msra.mxu0 0.0
    %121 = vmatprep.subr.mxu0 0.0
    %122 = vmatpush2.msra.mxu0 0.0
    %123 = vmatprep.subr.mxu0 0.0
    %124 = vmatpush2.msra.mxu0 0.0
    %125 = vmatprep.subr.mxu0 0.0
    %126 = vmatpush2.msra.mxu0 0.0
    %127 = vmatprep.subr.mxu0 0.0
    %128 = vmatpush2.msra.mxu0 0.0
    %129 = vmatprep.mubr.f32.mxu0 0.0
    %130 = vmatmul.mubr.f32.gmra.mxu0 %v60
    %v131 = vpop.f32.mrf.mxu0
    %v132 = vadd.f32 0.0, %v131
    %v133 = vpop.f32.mrf.mxu0
    %134 = vmatprep.mubr.f32.mxu0 0.0
    %135 = vmatmul.mubr.f32.gmra.mxu0 %v63
    %v136 = vpop.f32.mrf.mxu0
    %v137 = vadd.f32 0.0, %v136
    %v138 = vpop.f32.mrf.mxu0
    %139 = vdwg.mxu0
    %v140 = vadd.f32 %v50, %v132
    %v141 = vadd.f32 %v51, %v137
    %vm142 = vcmask 785408
    %143 = vst.msk [vmem:[#allocation2] sm:$0xff] %vm142, %v140
    %144 = vst.msk [vmem:[#allocation2 + $0x8] sm:$0xff] %vm142, %v141
    // Predicated region
    $region26: #{tpu_custom_call.1} parent=1 // pred_check
      %p145 = pneg %p43
    $region27: #{tpu_custom_call.1} parent=1 // pred_check_branch
      %147 = sbr.rel (%p145) target = $region29
    $region28: #{tpu_custom_call.1} parent=1 // pred_region
      %v148 = vld [vmem:[#allocation2] sm:$0xff]
      %v149 = vld [vmem:[#allocation2 + $0x8] sm:$0xff]
      %v150 = vld [vmem:[%s2] sm:$0x1]
      %v152 = vlaneseq
      %v153 = vshrl.u32 %v152, 7
      %v154 = vsub.s32 0, %v153
      %v155 = vrot.slane %v150, %v154
      %v157 = vadd.f32 %v148, %v155
      %v158 = vadd.f32 %v149, %v155
      %159 = vst.msk [vmem:[#allocation8] sm:$0xff] %vm142, %v157
      %160 = vst.msk [vmem:[#allocation8 + $0x8] sm:$0xff] %vm142, %v158
    $region29: #{tpu_custom_call.1} parent=1 // pred_fallthru
      _
    // Predicated region
    $region30: #{tpu_custom_call.1} parent=1 // pred_check
      _
    $region31: #{tpu_custom_call.1} parent=1 // pred_check_branch
      %162 = sbr.rel (0) target = $region33
    $region32: #{tpu_custom_call.1} parent=1 // pred_region
      %s164 = ssub.s32 256, 256
      %165 = vsyncadd [#allocation5], %s164
      %s166 = sshll.u32 [#allocation8], 4
      %s167 = int_to_ptr.vmem [resolvable:$true] %s166
      %172 = dma.vmem_to_hbm [thread:$0]  %s167, 256, %s3, [#allocation5], 128, 128, 8
    $region33: #{tpu_custom_call.1} parent=1 // pred_fallthru
      _
    // Predicated region
    $region34: #{tpu_custom_call.1} parent=1 // pred_check
      _
    $region35: #{tpu_custom_call.1} parent=1 // pred_check_branch
      %174 = sbr.rel (0) target = $region37
    $region36: #{tpu_custom_call.1} parent=1 // pred_region
      %175 = dma.done [#allocation5], 256
    $region37: #{tpu_custom_call.1} parent=1 // pred_fallthru
      _
    %176 = vsyncpa [#allocation4], 1
    %177 = vsyncpa [#allocation7], 1
    %178 = vsyncpa [#allocation5], 1

</llo_original>
